<compile_context>
chip_gen: v7x
topology: tpu7x:2x2x1
jax: 0.10.0
libtpu: 0.0.40
codegen_flags: <defaults>
</compile_context>

<pallas_src>
import math

import jax
import jax.numpy as jnp
from jax.experimental import pallas as pl
from jax.experimental.pallas import tpu as pltpu


# -----------------------------------------------------------------------------
# Pallas kernel: identity copy of one (TILE_M, COLS) tile
# -----------------------------------------------------------------------------

def _copy_kernel(x_ref, o_ref):
    o_ref[...] = x_ref[...]


def _choose_view(total: int, last: int):
    """Pick a lane-dense (rows, cols) factorization of the flat element count.

    Prefers cols that are a multiple of 128 (unmasked full-lane stores); falls
    back to the original trailing dim when the total doesn't factor nicely.
    """
    for cols in (1024, 512, 256, 128):
        if total % cols == 0:
            return total // cols, cols
    return total // last, last


def _pick_row_tile(rows: int, cols: int, itemsize: int,
                   budget_bytes: int = 2 * 1024 * 1024) -> int:
    """Largest sublane-aligned row tile dividing `rows` within a VMEM budget.

    Budget is per block; with input + output each double-buffered the peak
    VMEM use is ~4x this, comfortably under the default scoped-VMEM limit.
    Falls back to the full row extent (always a legal block) otherwise.
    """
    max_tm = max(budget_bytes // max(cols * itemsize, 1), 8)
    for tm in (2048, 1024, 512, 256, 128, 64, 32, 16, 8):
        if tm <= max_tm and rows % tm == 0:
            return tm
    return rows


# -----------------------------------------------------------------------------
# nnUnsqueeze.forward
# -----------------------------------------------------------------------------

def nn_unsqueeze(x):
    """Pallas equivalent of torch `x[:, :, None, None]`.

    Works for any ndim >= 2: output shape = x.shape[:2] + (1, 1) + x.shape[2:].
    The data copy runs on a lane-dense flattened 2-D view; the singleton-dim
    insertion is a free metadata reshape on the result.
    """
    assert x.ndim >= 2, "nnUnsqueeze expects at least a 2-D input"
    out_shape = x.shape[:2] + (1, 1) + x.shape[2:]

    total = math.prod(x.shape)
    rows, cols = _choose_view(total, x.shape[-1])
    x2d = x.reshape(rows, cols)          # row-major reshape: pure metadata

    itemsize = jnp.dtype(x.dtype).itemsize
    tm = _pick_row_tile(rows, cols, itemsize)
    grid = (rows // tm,)

    y2d = pl.pallas_call(
        _copy_kernel,
        out_shape=jax.ShapeDtypeStruct((rows, cols), x.dtype),
        grid=grid,
        in_specs=[pl.BlockSpec((tm, cols), lambda i: (i, 0))],
        out_specs=pl.BlockSpec((tm, cols), lambda i: (i, 0)),
        compiler_params=pltpu.CompilerParams(
            dimension_semantics=("parallel",)),
    )(x2d)

    # Adding the (1, 1) dims is pure metadata — done outside the kernel so the
    # kernel's output layout stays lane-dense.
    return y2d.reshape(out_shape)


# -----------------------------------------------------------------------------
# Demo
# -----------------------------------------------------------------------------

if __name__ == "__main__":
    key = jax.random.PRNGKey(0)

    # (batch, channels) input, as produced upstream in ecbnn right before the
    # unsqueeze feeds a conv stack.
    batch, channels = 4, 128
    x = jax.random.normal(key, (batch, channels), jnp.float32)

    out = nn_unsqueeze(x)
    jax.block_until_ready(out)

    ref = x[:, :, None, None]
    assert out.shape == (batch, channels, 1, 1), out.shape
    assert bool(jnp.array_equal(out, ref))

    # Also exercise a small, non-128-aligned shape (full-extent block path).
    x_small = jax.random.normal(jax.random.PRNGKey(1), (3, 5), jnp.float32)
    out_small = nn_unsqueeze(x_small)
    jax.block_until_ready(out_small)
    assert out_small.shape == (3, 5, 1, 1)
    assert bool(jnp.array_equal(out_small, x_small[:, :, None, None]))

    print("KERNEL_OK")
</pallas_src>

<mosaic_0001>
module attributes {stable_mosaic.version = 11 : i64} {
  func.func @_copy_kernel(%arg0: i32, %arg1: memref<1x512xf32, #tpu.memory_space<vmem>>, %arg2: memref<1x512xf32, #tpu.memory_space<vmem>>) attributes {dimension_semantics = [#tpu.dimension_semantics<parallel>], iteration_bounds = array<i64: 1>, scalar_prefetch = 0 : i64, scratch_operands = 0 : i64, tpu.core_type = #tpu.core_type<tc>, window_params = [{transform_indices = @transform_0, window_bounds = array<i64: 1, 512>}, {transform_indices = @transform_1, window_bounds = array<i64: 1, 512>}]} {
    %c0 = arith.constant 0 : index
    %c0_0 = arith.constant 0 : index
    %0 = vector.load %arg1[%c0, %c0_0] : memref<1x512xf32, #tpu.memory_space<vmem>>, vector<1x512xf32>
    %c0_1 = arith.constant 0 : index
    %c0_2 = arith.constant 0 : index
    %1 = vector.load %arg2[%c0_1, %c0_2] : memref<1x512xf32, #tpu.memory_space<vmem>>, vector<1x512xf32>
    tpu.vector_store %arg2[%c0_1, %c0_2], %0 {strides = array<i32>} : memref<1x512xf32, #tpu.memory_space<vmem>>, vector<1x512xf32>,
    return
  }
  func.func @transform_0(%arg0: i32) -> (i32, i32) {
    %c0_i32 = arith.constant 0 : i32
    %c0_i32_0 = arith.constant 0 : i32
    return %arg0, %c0_i32 : i32, i32
  }
  func.func @transform_1(%arg0: i32) -> (i32, i32) {
    %c0_i32 = arith.constant 0 : i32
    %c0_i32_0 = arith.constant 0 : i32
    return %arg0, %c0_i32 : i32, i32
  }
}

</mosaic_0001>

<llo_original>
// kernel: tpu_custom_call.1
$region0: #{tpu_custom_call.1}
  #allocation0 [shape = 'u32[]', space=smem, size = 0x4, offset = 0x4, fixed_abs, tag = 'smem constant byte address 0x4 - core index']
  #allocation1 [shape = 'u32[144,128]{1,0:T(1,128)}', space=vmem, size = 0x12000, scoped, tag = 'internal scratch']
  %s0 = inlined_call_operand.hbm [shape: f32[1,512], index: 0, kind: input, shape index: {}]
  %s1 = inlined_call_operand.hbm [shape: f32[1,512], index: 1, kind: output, shape index: {}]
  %s2 = sld [smem:[#allocation0]]
  $region18: #{tpu_custom_call.1} parent=0
    _
  %s4 = ssub.s32 1, %s2
  %s5 = scalar_select 0, %s4, %s2
  $region1: #{tpu_custom_call.1} parent=0
    #allocation2 [shape = 'u8[2048]{0}', space=vmem, size = 0x800, scoped, tag = 'input window, operand 0, single buffered']
    #allocation3 [shape = 's32[1]{0}', space=sflag, size = 0x4, scoped, tag = 'scoped memory for tpu_custom_call.1']
    #allocation4 [shape = 's32[1]{0}', space=sflag, size = 0x4, scoped, tag = 'scoped memory for tpu_custom_call.1']
    #allocation5 [shape = 'u8[2048]{0}', space=vmem, size = 0x800, scoped, tag = 'output window, operand 0, single buffered']
    %6 = vsyncpa [#allocation3], 0
    %7 = vsyncpa [#allocation4], 0
    // Predicated region
    $region2: #{tpu_custom_call.1} parent=1 // pred_check
      _
    $region3: #{tpu_custom_call.1} parent=1 // pred_check_branch
      %9 = sbr.rel (0) target = $region5
    $region4: #{tpu_custom_call.1} parent=1 // pred_region
      %s11 = ssub.s32 64, 64
      %12 = vsyncadd [#allocation3], %s11
      %s14 = sshll.u32 [#allocation2], 4
      %s15 = int_to_ptr.vmem [resolvable:$true] %s14
      %17 = dma.hbm_to_vmem [thread:$0]  %s0, 64, %s15, [#allocation3]
    $region5: #{tpu_custom_call.1} parent=1 // pred_fallthru
      _
    // Predicated region
    $region6: #{tpu_custom_call.1} parent=1 // pred_check
      _
    $region7: #{tpu_custom_call.1} parent=1 // pred_check_branch
      %19 = sbr.rel (0) target = $region9
    $region8: #{tpu_custom_call.1} parent=1 // pred_region
      %20 = dma.done [#allocation3], 64
    $region9: #{tpu_custom_call.1} parent=1 // pred_fallthru
      _
    %v21 = vld [vmem:[#allocation2] sm:$0xf]
    %v22 = vlaneseq
    %vm23 = vcmp.ge.s32.totalorder %v22, 0
    %vm24 = vcmp.lt.s32.totalorder %v22, 512
    %vm25 = vmand %vm23, %vm24
    %26 = vst.msk [vmem:[#allocation5] sm:$0xf] %vm25, %v21
    // Predicated region
    $region10: #{tpu_custom_call.1} parent=1 // pred_check
      _
    $region11: #{tpu_custom_call.1} parent=1 // pred_check_branch
      %28 = sbr.rel (0) target = $region13
    $region12: #{tpu_custom_call.1} parent=1 // pred_region
      %s30 = ssub.s32 64, 64
      %31 = vsyncadd [#allocation4], %s30
      %s33 = sshll.u32 [#allocation5], 4
      %s34 = int_to_ptr.vmem [resolvable:$true] %s33
      %36 = dma.vmem_to_hbm [thread:$0]  %s34, 64, %s1, [#allocation4]
    $region13: #{tpu_custom_call.1} parent=1 // pred_fallthru
      _
    // Predicated region
    $region14: #{tpu_custom_call.1} parent=1 // pred_check
      _
    $region15: #{tpu_custom_call.1} parent=1 // pred_check_branch
      %38 = sbr.rel (0) target = $region17
    $region16: #{tpu_custom_call.1} parent=1 // pred_region
      %39 = dma.done [#allocation4], 64
    $region17: #{tpu_custom_call.1} parent=1 // pred_fallthru
      _
    %40 = vsyncpa [#allocation3], 1
    %41 = vsyncpa [#allocation4], 1

</llo_original>
